<compile_context>
chip_gen: v7x
topology: tpu7x:2x2x1
jax: 0.10.0
libtpu: 0.0.40
codegen_flags: <defaults>
</compile_context>

<pallas_src>
import math

import jax
import jax.numpy as jnp
from jax.experimental import pallas as pl
from jax.experimental.pallas import tpu as pltpu


def _loss_kernel(n_ref, o_ref, t_ref, out_ref, acc_cross, acc_dot, acc_lp):
    i = pl.program_id(0)

    @pl.when(i == 0)
    def _init():
        acc_cross[...] = jnp.zeros_like(acc_cross)
        acc_dot[...] = jnp.zeros_like(acc_dot)
        acc_lp[...] = jnp.zeros_like(acc_lp)

    o = o_ref[...]                      # [6, TB]  rows: x, y, z, w, pitch, yaw
    t = t_ref[...]                      # [6, TB]
    tb = o.shape[1]

    n = n_ref[0]                        # true batch size (scalar, SMEM)
    lane = jax.lax.broadcasted_iota(jnp.int32, (1, tb), 1) + i * tb
    mask = (lane < n).astype(jnp.float32)          # [1, TB] valid-lane mask

    two_pi = 2.0 * math.pi

    def euler_to_vec(pitch01, yaw01):
        # Third column of the Euler rotation matrix applied to the z-axis:
        #   [r13, r23, r33] = [s2, -c2*s1, c1*c2]   (roll-independent).
        # This is unit-norm by construction, so no normalization is needed.
        pitch = two_pi * (pitch01 - 0.5)
        yaw = two_pi * (yaw01 - 0.5)
        c1, c2 = jnp.cos(pitch), jnp.cos(yaw)
        s1, s2 = jnp.sin(pitch), jnp.sin(yaw)
        return s2, -c2 * s1, c1 * c2

    ox, oy, oz = euler_to_vec(o[4:5, :], o[5:6, :])
    tx, ty, tz = euler_to_vec(t[4:5, :], t[5:6, :])

    # Per-row cross-product squared magnitude and dot product.
    cx = oy * tz - oz * ty
    cy = oz * tx - ox * tz
    cz = ox * ty - oy * tx
    cross_sq = (cx * cx + cy * cy + cz * cz) * mask    # [1, TB]
    dot = (ox * tx + oy * ty + oz * tz) * mask         # [1, TB]

    # Position squared error.
    d = o[0:4, :] - t[0:4, :]
    lp = jnp.sum(d * d, axis=0, keepdims=True) * mask  # [1, TB]

    acc_cross[...] += cross_sq
    acc_dot[...] += dot
    acc_lp[...] += lp

    @pl.when(i == pl.num_programs(0) - 1)
    def _finalize():
        nf = n.astype(jnp.float32)
        s_cross = jnp.sum(acc_cross[...])
        s_dot = jnp.sum(acc_dot[...])
        s_lp = jnp.sum(acc_lp[...])
        # torch.norm(cross) with no dim == Frobenius norm over the whole
        # [B, 3] tensor, broadcast into every row's L_a.
        mean_la = jnp.sqrt(s_cross) + 1.0 - s_dot / nf
        mean_lp = s_lp / nf
        out_ref[0] = mean_la + mean_lp
        out_ref[1] = mean_la
        out_ref[2] = mean_lp


def _round_up(x, m):
    return ((x + m - 1) // m) * m


def custom_loss(output, target):
    """Pallas implementation of CustomLoss.forward.

    output, target: [B, 7] float32 (4 position values + 3 euler angles).
    Returns (loss, mean_L_a, mean_L_p) as float32 scalars.
    """
    assert output.shape == target.shape and output.shape[1] == 7
    B = output.shape[0]

    # Lane-dense layout: drop the unused roll column, transpose to [6, B].
    o = jnp.transpose(output[:, :6].astype(jnp.float32))   # [6, B]
    t = jnp.transpose(target[:, :6].astype(jnp.float32))   # [6, B]

    # Tile the batch (lane) axis.  TB must be a multiple of 128; cap it so
    # padding stays modest while per-step overhead is amortized.
    TB = min(8192, _round_up(B, 128))
    B_pad = _round_up(B, TB)
    if B_pad != B:
        pad = B_pad - B
        o = jnp.pad(o, ((0, 0), (0, pad)))
        t = jnp.pad(t, ((0, 0), (0, pad)))
    grid = (B_pad // TB,)

    n = jnp.array([B], dtype=jnp.int32)   # true batch size -> scalar prefetch

    in_block = pl.BlockSpec((6, TB), lambda i, n_ref: (0, i))

    out = pl.pallas_call(
        _loss_kernel,
        out_shape=jax.ShapeDtypeStruct((3,), jnp.float32),
        grid_spec=pltpu.PrefetchScalarGridSpec(
            num_scalar_prefetch=1,
            grid=grid,
            in_specs=[in_block, in_block],
            out_specs=pl.BlockSpec(memory_space=pltpu.MemorySpace.SMEM),
            scratch_shapes=[
                pltpu.VMEM((1, TB), jnp.float32),   # sum |cross|^2 per lane
                pltpu.VMEM((1, TB), jnp.float32),   # sum dot per lane
                pltpu.VMEM((1, TB), jnp.float32),   # sum L_p per lane
            ],
        ),
        compiler_params=pltpu.CompilerParams(
            dimension_semantics=("arbitrary",),     # serial accumulation axis
            vmem_limit_bytes=16 * 1024 * 1024,      # tiny tiles; safe on v5e/v6e/v7x
        ),
    )(n, o, t)
    return out[0], out[1], out[2]


def _reference(output, target):
    # Pure-JAX reference mirroring the PyTorch code (normalization kept).
    two_pi = 2.0 * math.pi
    o_a = two_pi * (output[:, 4:] - 0.5)
    t_a = two_pi * (target[:, 4:] - 0.5)
    o_p, t_p = output[:, :4], target[:, :4]

    def e2v(a):
        pitch, yaw, roll = a[:, 0], a[:, 1], a[:, 2]
        c1, c2, c3 = jnp.cos(pitch), jnp.cos(yaw), jnp.cos(roll)
        s1, s2, s3 = jnp.sin(pitch), jnp.sin(yaw), jnp.sin(roll)
        r = jnp.stack([
            jnp.stack([c2 * c3, -c2 * s3, s2], axis=1),
            jnp.stack([c1 * s3 + c3 * s1 * s2, c1 * c3 - s1 * s2 * s3, -c2 * s1], axis=1),
            jnp.stack([s1 * s3 - c1 * c3 * s2, c3 * s1 + c1 * s2 * s3, c1 * c2], axis=1),
        ], axis=1)
        v = r @ jnp.array([0.0, 0.0, 1.0], jnp.float32)
        return v / jnp.linalg.norm(v, axis=-1, keepdims=True)

    vo, vt = e2v(o_a), e2v(t_a)
    L_a = jnp.linalg.norm(jnp.cross(vo, vt)) + (1.0 - jnp.sum(vo * vt, axis=1))
    L_p = jnp.sum((o_p - t_p) ** 2, axis=1)
    return jnp.mean(L_p + L_a), jnp.mean(L_a), jnp.mean(L_p)


if __name__ == "__main__":
    key = jax.random.PRNGKey(0)

    ok = True
    for B in (8, 200):   # second case exercises lane-padding masking
        key, k1, k2 = jax.random.split(key, 3)
        output = jax.random.uniform(k1, (B, 7), dtype=jnp.float32)
        target = jax.random.uniform(k2, (B, 7), dtype=jnp.float32)

        loss, la, lp = jax.block_until_ready(custom_loss(output, target))
        ref = _reference(output, target)

        ok &= bool(jnp.allclose(loss, ref[0], atol=1e-5, rtol=1e-5))
        ok &= bool(jnp.allclose(la, ref[1], atol=1e-5, rtol=1e-5))
        ok &= bool(jnp.allclose(lp, ref[2], atol=1e-5, rtol=1e-5))

    assert ok, "mismatch vs reference"
    print("KERNEL_OK")
</pallas_src>

<mosaic_0001>
module attributes {stable_mosaic.version = 11 : i64} {
  func.func @_loss_kernel(%arg0: i32, %arg1: memref<1xi32, #tpu.memory_space<smem>>, %arg2: memref<6x128xf32, #tpu.memory_space<vmem>>, %arg3: memref<6x128xf32, #tpu.memory_space<vmem>>, %arg4: memref<3xf32, #tpu.memory_space<smem>>, %arg5: memref<1x128xf32, #tpu.memory_space<vmem>>, %arg6: memref<1x128xf32, #tpu.memory_space<vmem>>, %arg7: memref<1x128xf32, #tpu.memory_space<vmem>>) attributes {dimension_semantics = [#tpu.dimension_semantics<arbitrary>], iteration_bounds = array<i64: 1>, scalar_prefetch = 1 : i64, scratch_operands = 3 : i64, tpu.core_type = #tpu.core_type<tc>, window_params = [{transform_indices = @transform_0, window_bounds = array<i64: 6, 128>}, {transform_indices = @transform_1, window_bounds = array<i64: 6, 128>}, {transform_indices = @transform_2, window_bounds = array<i64: 3>}]} {
    %c0_i32 = arith.constant 0 : i32
    %0 = arith.cmpi eq, %arg0, %c0_i32 : i32
    %1 = arith.extui %0 : i1 to i32
    %c0_i32_0 = arith.constant 0 : i32
    %2 = arith.cmpi ne, %1, %c0_i32_0 : i32
    scf.if %2 {
      %cst_29 = arith.constant 0.000000e+00 : f32
      %90 = vector.broadcast %cst_29 : f32 to vector<1x128xf32>
      %c0_30 = arith.constant 0 : index
      %c0_31 = arith.constant 0 : index
      %91 = vector.load %arg5[%c0_30, %c0_31] : memref<1x128xf32, #tpu.memory_space<vmem>>, vector<1x128xf32>
      tpu.vector_store %arg5[%c0_30, %c0_31], %90 {strides = array<i32>} : memref<1x128xf32, #tpu.memory_space<vmem>>, vector<1x128xf32>,
      %cst_32 = arith.constant 0.000000e+00 : f32
      %92 = vector.broadcast %cst_32 : f32 to vector<1x128xf32>
      %c0_33 = arith.constant 0 : index
      %c0_34 = arith.constant 0 : index
      %93 = vector.load %arg6[%c0_33, %c0_34] : memref<1x128xf32, #tpu.memory_space<vmem>>, vector<1x128xf32>
      tpu.vector_store %arg6[%c0_33, %c0_34], %92 {strides = array<i32>} : memref<1x128xf32, #tpu.memory_space<vmem>>, vector<1x128xf32>,
      %cst_35 = arith.constant 0.000000e+00 : f32
      %94 = vector.broadcast %cst_35 : f32 to vector<1x128xf32>
      %c0_36 = arith.constant 0 : index
      %c0_37 = arith.constant 0 : index
      %95 = vector.load %arg7[%c0_36, %c0_37] : memref<1x128xf32, #tpu.memory_space<vmem>>, vector<1x128xf32>
      tpu.vector_store %arg7[%c0_36, %c0_37], %94 {strides = array<i32>} : memref<1x128xf32, #tpu.memory_space<vmem>>, vector<1x128xf32>,
    } else {
    }
    %c0 = arith.constant 0 : index
    %c0_1 = arith.constant 0 : index
    %3 = vector.load %arg2[%c0, %c0_1] : memref<6x128xf32, #tpu.memory_space<vmem>>, vector<6x128xf32>
    %c0_2 = arith.constant 0 : index
    %c0_3 = arith.constant 0 : index
    %4 = vector.load %arg3[%c0_2, %c0_3] : memref<6x128xf32, #tpu.memory_space<vmem>>, vector<6x128xf32>
    %c0_4 = arith.constant 0 : index
    %5 = memref.load %arg1[%c0_4] : memref<1xi32, #tpu.memory_space<smem>>
    %6 = tpu.iota {dimensions = array<i32: 1>} : vector<1x128xi32>
    %c128_i32 = arith.constant 128 : i32
    %7 = arith.muli %arg0, %c128_i32 : i32
    %8 = vector.broadcast %7 : i32 to vector<1x128xi32>
    %9 = arith.addi %6, %8 : vector<1x128xi32>
    %10 = vector.broadcast %5 : i32 to vector<1x128xi32>
    %11 = arith.cmpi slt, %9, %10 : vector<1x128xi32>
    %12 = arith.extui %11 : vector<1x128xi1> to vector<1x128xi32>
    %13 = arith.sitofp %12 : vector<1x128xi32> to vector<1x128xf32>
    %14 = vector.extract_strided_slice %3 {offsets = [4, 0], sizes = [1, 128], strides = [1, 1]} : vector<6x128xf32> to vector<1x128xf32>
    %15 = vector.extract_strided_slice %3 {offsets = [5, 0], sizes = [1, 128], strides = [1, 1]} : vector<6x128xf32> to vector<1x128xf32>
    %cst = arith.constant 5.000000e-01 : f32
    %16 = vector.broadcast %cst : f32 to vector<1x128xf32>
    %17 = arith.subf %14, %16 : vector<1x128xf32>
    %cst_5 = arith.constant 6.28318548 : f32
    %18 = vector.broadcast %cst_5 : f32 to vector<1x128xf32>
    %19 = arith.mulf %18, %17 : vector<1x128xf32>
    %cst_6 = arith.constant 5.000000e-01 : f32
    %20 = vector.broadcast %cst_6 : f32 to vector<1x128xf32>
    %21 = arith.subf %15, %20 : vector<1x128xf32>
    %cst_7 = arith.constant 6.28318548 : f32
    %22 = vector.broadcast %cst_7 : f32 to vector<1x128xf32>
    %23 = arith.mulf %22, %21 : vector<1x128xf32>
    %24 = math.cos %19 : vector<1x128xf32>
    %25 = math.cos %23 : vector<1x128xf32>
    %26 = math.sin %19 : vector<1x128xf32>
    %27 = math.sin %23 : vector<1x128xf32>
    %cst_8 = arith.constant 0.000000e+00 : f32
    %28 = vector.broadcast %cst_8 : f32 to vector<1x128xf32>
    %29 = arith.subf %28, %25 : vector<1x128xf32>
    %30 = arith.mulf %29, %26 : vector<1x128xf32>
    %31 = arith.mulf %24, %25 : vector<1x128xf32>
    %32 = vector.extract_strided_slice %4 {offsets = [4, 0], sizes = [1, 128], strides = [1, 1]} : vector<6x128xf32> to vector<1x128xf32>
    %33 = vector.extract_strided_slice %4 {offsets = [5, 0], sizes = [1, 128], strides = [1, 1]} : vector<6x128xf32> to vector<1x128xf32>
    %cst_9 = arith.constant 5.000000e-01 : f32
    %34 = vector.broadcast %cst_9 : f32 to vector<1x128xf32>
    %35 = arith.subf %32, %34 : vector<1x128xf32>
    %cst_10 = arith.constant 6.28318548 : f32
    %36 = vector.broadcast %cst_10 : f32 to vector<1x128xf32>
    %37 = arith.mulf %36, %35 : vector<1x128xf32>
    %cst_11 = arith.constant 5.000000e-01 : f32
    %38 = vector.broadcast %cst_11 : f32 to vector<1x128xf32>
    %39 = arith.subf %33, %38 : vector<1x128xf32>
    %cst_12 = arith.constant 6.28318548 : f32
    %40 = vector.broadcast %cst_12 : f32 to vector<1x128xf32>
    %41 = arith.mulf %40, %39 : vector<1x128xf32>
    %42 = math.cos %37 : vector<1x128xf32>
    %43 = math.cos %41 : vector<1x128xf32>
    %44 = math.sin %37 : vector<1x128xf32>
    %45 = math.sin %41 : vector<1x128xf32>
    %cst_13 = arith.constant 0.000000e+00 : f32
    %46 = vector.broadcast %cst_13 : f32 to vector<1x128xf32>
    %47 = arith.subf %46, %43 : vector<1x128xf32>
    %48 = arith.mulf %47, %44 : vector<1x128xf32>
    %49 = arith.mulf %42, %43 : vector<1x128xf32>
    %50 = arith.mulf %30, %49 : vector<1x128xf32>
    %51 = arith.mulf %31, %48 : vector<1x128xf32>
    %52 = arith.subf %50, %51 : vector<1x128xf32>
    %53 = arith.mulf %31, %45 : vector<1x128xf32>
    %54 = arith.mulf %27, %49 : vector<1x128xf32>
    %55 = arith.subf %53, %54 : vector<1x128xf32>
    %56 = arith.mulf %27, %48 : vector<1x128xf32>
    %57 = arith.mulf %30, %45 : vector<1x128xf32>
    %58 = arith.subf %56, %57 : vector<1x128xf32>
    %59 = arith.mulf %52, %52 : vector<1x128xf32>
    %60 = arith.mulf %55, %55 : vector<1x128xf32>
    %61 = arith.addf %59, %60 : vector<1x128xf32>
    %62 = arith.mulf %58, %58 : vector<1x128xf32>
    %63 = arith.addf %61, %62 : vector<1x128xf32>
    %64 = arith.mulf %63, %13 : vector<1x128xf32>
    %65 = arith.mulf %27, %45 : vector<1x128xf32>
    %66 = arith.mulf %30, %48 : vector<1x128xf32>
    %67 = arith.addf %65, %66 : vector<1x128xf32>
    %68 = arith.mulf %31, %49 : vector<1x128xf32>
    %69 = arith.addf %67, %68 : vector<1x128xf32>
    %70 = arith.mulf %69, %13 : vector<1x128xf32>
    %71 = vector.extract_strided_slice %3 {offsets = [0, 0], sizes = [4, 128], strides = [1, 1]} : vector<6x128xf32> to vector<4x128xf32>
    %72 = vector.extract_strided_slice %4 {offsets = [0, 0], sizes = [4, 128], strides = [1, 1]} : vector<6x128xf32> to vector<4x128xf32>
    %73 = arith.subf %71, %72 : vector<4x128xf32>
    %74 = arith.mulf %73, %73 : vector<4x128xf32>
    %cst_14 = arith.constant dense<0.000000e+00> : vector<128xf32>
    %75 = vector.multi_reduction <add>, %74, %cst_14 [0] : vector<4x128xf32> to vector<128xf32>
    %76 = vector.shape_cast %75 : vector<128xf32> to vector<1x128xf32>
    %77 = arith.mulf %76, %13 : vector<1x128xf32>
    %c0_15 = arith.constant 0 : index
    %c0_16 = arith.constant 0 : index
    %78 = vector.load %arg5[%c0_15, %c0_16] : memref<1x128xf32, #tpu.memory_space<vmem>>, vector<1x128xf32>
    %79 = arith.addf %78, %64 : vector<1x128xf32>
    %c0_17 = arith.constant 0 : index
    %c0_18 = arith.constant 0 : index
    %80 = vector.load %arg5[%c0_17, %c0_18] : memref<1x128xf32, #tpu.memory_space<vmem>>, vector<1x128xf32>
    tpu.vector_store %arg5[%c0_17, %c0_18], %79 {strides = array<i32>} : memref<1x128xf32, #tpu.memory_space<vmem>>, vector<1x128xf32>,
    %c0_19 = arith.constant 0 : index
    %c0_20 = arith.constant 0 : index
    %81 = vector.load %arg6[%c0_19, %c0_20] : memref<1x128xf32, #tpu.memory_space<vmem>>, vector<1x128xf32>
    %82 = arith.addf %81, %70 : vector<1x128xf32>
    %c0_21 = arith.constant 0 : index
    %c0_22 = arith.constant 0 : index
    %83 = vector.load %arg6[%c0_21, %c0_22] : memref<1x128xf32, #tpu.memory_space<vmem>>, vector<1x128xf32>
    tpu.vector_store %arg6[%c0_21, %c0_22], %82 {strides = array<i32>} : memref<1x128xf32, #tpu.memory_space<vmem>>, vector<1x128xf32>,
    %c0_23 = arith.constant 0 : index
    %c0_24 = arith.constant 0 : index
    %84 = vector.load %arg7[%c0_23, %c0_24] : memref<1x128xf32, #tpu.memory_space<vmem>>, vector<1x128xf32>
    %85 = arith.addf %84, %77 : vector<1x128xf32>
    %c0_25 = arith.constant 0 : index
    %c0_26 = arith.constant 0 : index
    %86 = vector.load %arg7[%c0_25, %c0_26] : memref<1x128xf32, #tpu.memory_space<vmem>>, vector<1x128xf32>
    tpu.vector_store %arg7[%c0_25, %c0_26], %85 {strides = array<i32>} : memref<1x128xf32, #tpu.memory_space<vmem>>, vector<1x128xf32>,
    %c0_i32_27 = arith.constant 0 : i32
    %87 = arith.cmpi eq, %arg0, %c0_i32_27 : i32
    %88 = arith.extui %87 : i1 to i32
    %c0_i32_28 = arith.constant 0 : i32
    %89 = arith.cmpi ne, %88, %c0_i32_28 : i32
    scf.if %89 {
      %90 = arith.sitofp %5 : i32 to f32
      %c0_29 = arith.constant 0 : index
      %c0_30 = arith.constant 0 : index
      %91 = vector.load %arg5[%c0_29, %c0_30] : memref<1x128xf32, #tpu.memory_space<vmem>>, vector<1x128xf32>
      %92 = vector.shape_cast %91 : vector<1x128xf32> to vector<1x1x128xf32>
      %cst_31 = arith.constant dense<0.000000e+00> : vector<1xf32>
      %93 = vector.multi_reduction <add>, %92, %cst_31 [1, 2] : vector<1x1x128xf32> to vector<1xf32>
      %94 = vector.shape_cast %93 : vector<1xf32> to vector<1x1x1xf32>
      %95 = vector.extract %94[0, 0, 0] : f32 from vector<1x1x1xf32>
      %c0_32 = arith.constant 0 : index
      %c0_33 = arith.constant 0 : index
      %96 = vector.load %arg6[%c0_32, %c0_33] : memref<1x128xf32, #tpu.memory_space<vmem>>, vector<1x128xf32>
      %97 = vector.shape_cast %96 : vector<1x128xf32> to vector<1x1x128xf32>
      %cst_34 = arith.constant dense<0.000000e+00> : vector<1xf32>
      %98 = vector.multi_reduction <add>, %97, %cst_34 [1, 2] : vector<1x1x128xf32> to vector<1xf32>
      %99 = vector.shape_cast %98 : vector<1xf32> to vector<1x1x1xf32>
      %100 = vector.extract %99[0, 0, 0] : f32 from vector<1x1x1xf32>
      %c0_35 = arith.constant 0 : index
      %c0_36 = arith.constant 0 : index
      %101 = vector.load %arg7[%c0_35, %c0_36] : memref<1x128xf32, #tpu.memory_space<vmem>>, vector<1x128xf32>
      %102 = vector.shape_cast %101 : vector<1x128xf32> to vector<1x1x128xf32>
      %cst_37 = arith.constant dense<0.000000e+00> : vector<1xf32>
      %103 = vector.multi_reduction <add>, %102, %cst_37 [1, 2] : vector<1x1x128xf32> to vector<1xf32>
      %104 = vector.shape_cast %103 : vector<1xf32> to vector<1x1x1xf32>
      %105 = vector.extract %104[0, 0, 0] : f32 from vector<1x1x1xf32>
      %106 = math.sqrt %95 : f32
      %cst_38 = arith.constant 1.000000e+00 : f32
      %107 = arith.addf %106, %cst_38 : f32
      %108 = arith.divf %100, %90 : f32
      %109 = arith.subf %107, %108 : f32
      %110 = arith.divf %105, %90 : f32
      %111 = arith.addf %109, %110 : f32
      %c0_39 = arith.constant 0 : index
      %112 = memref.load %arg4[%c0_39] : memref<3xf32, #tpu.memory_space<smem>>
      memref.store %111, %arg4[%c0_39] : memref<3xf32, #tpu.memory_space<smem>>
      %c1 = arith.constant 1 : index
      %113 = memref.load %arg4[%c1] : memref<3xf32, #tpu.memory_space<smem>>
      memref.store %109, %arg4[%c1] : memref<3xf32, #tpu.memory_space<smem>>
      %c2 = arith.constant 2 : index
      %114 = memref.load %arg4[%c2] : memref<3xf32, #tpu.memory_space<smem>>
      memref.store %110, %arg4[%c2] : memref<3xf32, #tpu.memory_space<smem>>
    } else {
    }
    return
  }
  func.func @transform_0(%arg0: i32, %arg1: memref<1xi32, #tpu.memory_space<smem>>) -> (i32, i32) {
    %c0_i32 = arith.constant 0 : i32
    %c0_i32_0 = arith.constant 0 : i32
    return %c0_i32, %arg0 : i32, i32
  }
  func.func @transform_1(%arg0: i32, %arg1: memref<1xi32, #tpu.memory_space<smem>>) -> (i32, i32) {
    %c0_i32 = arith.constant 0 : i32
    %c0_i32_0 = arith.constant 0 : i32
    return %c0_i32, %arg0 : i32, i32
  }
  func.func @transform_2(%arg0: i32, %arg1: memref<1xi32, #tpu.memory_space<smem>>) -> i32 {
    %c0_i32 = arith.constant 0 : i32
    %c0_i32_0 = arith.constant 0 : i32
    return %c0_i32 : i32
  }
}

</mosaic_0001>

<llo_original>
// kernel: tpu_custom_call.1
$region0: #{tpu_custom_call.1}
  #allocation0 [shape = 'u32[]', space=smem, size = 0x4, offset = 0x4, fixed_abs, tag = 'smem constant byte address 0x4 - core index']
  #allocation1 [shape = 'u32[144,128]{1,0:T(1,128)}', space=vmem, size = 0x12000, scoped, tag = 'internal scratch']
  #allocation2 [shape = 'f32[1,128]{1,0:T(1,128)}', space=vmem, size = 0x200, scoped, tag = 'scratch operand']
  #allocation3 [shape = 'f32[1,128]{1,0:T(1,128)}', space=vmem, size = 0x200, scoped, tag = 'scratch operand']
  #allocation4 [shape = 'f32[1,128]{1,0:T(1,128)}', space=vmem, size = 0x200, scoped, tag = 'scratch operand']
  #allocation5 [shape = 's32[1]{0}', space=sflag, size = 0x4, scoped, tag = 'scoped memory for tpu_custom_call.1']
  #allocation6 [shape = 's32[1]{0:T(128)S(6)}', space=smem, size = 0x200, scoped, tag = 'prefetched SMEM operand 0']
  %s0 = inlined_call_operand.<no memory space> [shape: s32[1], index: 0, kind: input, shape index: {}]
  %s1 = inlined_call_operand.hbm [shape: f32[6,128], index: 1, kind: input, shape index: {}]
  %s2 = inlined_call_operand.hbm [shape: f32[6,128], index: 2, kind: input, shape index: {}]
  %s3 = inlined_call_operand.hbm [shape: f32[3], index: 3, kind: output, shape index: {}]
  %s4 = sld [smem:[#allocation0]]
  $region34: #{tpu_custom_call.1} parent=0
    _
  %s6 = ssub.s32 1, %s4
  %s7 = scalar_select 0, %s6, %s4
  %8 = sst [smem:[#allocation6]] %s0
  $region1: #{tpu_custom_call.1} parent=0
    #allocation7 [shape = 'u8[4096]{0}', space=vmem, size = 0x1000, scoped, tag = 'input window, operand 1, single buffered']
    #allocation8 [shape = 's32[1]{0}', space=sflag, size = 0x4, scoped, tag = 'scoped memory for tpu_custom_call.1']
    #allocation9 [shape = 's32[1]{0}', space=sflag, size = 0x4, scoped, tag = 'scoped memory for tpu_custom_call.1']
    #allocation10 [shape = 'u8[4096]{0}', space=vmem, size = 0x1000, scoped, tag = 'input window, operand 2, single buffered']
    #allocation11 [shape = 's32[1]{0}', space=sflag, size = 0x4, scoped, tag = 'scoped memory for tpu_custom_call.1']
    #allocation12 [shape = 'u8[512]{0}', space=smem, size = 0x200, scoped, tag = 'output window, operand 0, single buffered']
    %9 = vsyncpa [#allocation8], 0
    %10 = vsyncpa [#allocation11], 0
    %11 = vsyncpa [#allocation9], 0
    // Predicated region
    $region2: #{tpu_custom_call.1} parent=1 // pred_check
      _
    $region3: #{tpu_custom_call.1} parent=1 // pred_check_branch
      %13 = sbr.rel (0) target = $region5
    $region4: #{tpu_custom_call.1} parent=1 // pred_region
      %s15 = ssub.s32 128, 128
      %16 = vsyncadd [#allocation8], %s15
      %s18 = sshll.u32 [#allocation7], 4
      %s19 = int_to_ptr.vmem [resolvable:$true] %s18
      %21 = dma.hbm_to_vmem [thread:$0]  %s1, 128, %s19, [#allocation8]
    $region5: #{tpu_custom_call.1} parent=1 // pred_fallthru
      _
    // Predicated region
    $region6: #{tpu_custom_call.1} parent=1 // pred_check
      _
    $region7: #{tpu_custom_call.1} parent=1 // pred_check_branch
      %23 = sbr.rel (0) target = $region9
    $region8: #{tpu_custom_call.1} parent=1 // pred_region
      %s25 = ssub.s32 128, 128
      %26 = vsyncadd [#allocation11], %s25
      %s28 = sshll.u32 [#allocation10], 4
      %s29 = int_to_ptr.vmem [resolvable:$true] %s28
      %31 = dma.hbm_to_vmem [thread:$0]  %s2, 128, %s29, [#allocation11]
    $region9: #{tpu_custom_call.1} parent=1 // pred_fallthru
      _
    // Predicated region
    $region10: #{tpu_custom_call.1} parent=1 // pred_check
      _
    $region11: #{tpu_custom_call.1} parent=1 // pred_check_branch
      %33 = sbr.rel (0) target = $region13
    $region12: #{tpu_custom_call.1} parent=1 // pred_region
      %34 = dma.done [#allocation8], 128
    $region13: #{tpu_custom_call.1} parent=1 // pred_fallthru
      _
    // Predicated region
    $region14: #{tpu_custom_call.1} parent=1 // pred_check
      _
    $region15: #{tpu_custom_call.1} parent=1 // pred_check_branch
      %36 = sbr.rel (0) target = $region17
    $region16: #{tpu_custom_call.1} parent=1 // pred_region
      %37 = dma.done [#allocation11], 128
    $region17: #{tpu_custom_call.1} parent=1 // pred_fallthru
      _
    %p38 = scmp.eq.s32.totalorder 0, 0
    // Predicated region
    $region18: #{tpu_custom_call.1} parent=1 // pred_check
      %p39 = pneg %p38
    $region19: #{tpu_custom_call.1} parent=1 // pred_check_branch
      %41 = sbr.rel (%p39) target = $region21
    $region20: #{tpu_custom_call.1} parent=1 // pred_region
      %42 = vst [vmem:[#allocation2] sm:$0x1] 0.0
      %43 = vst [vmem:[#allocation3] sm:$0x1] 0.0
      %44 = vst [vmem:[#allocation4] sm:$0x1] 0.0
    $region21: #{tpu_custom_call.1} parent=1 // pred_fallthru
      _
    %v45 = vld [vmem:[#allocation7] sm:$0x3f]
    %v46 = vld [vmem:[#allocation10] sm:$0x3f]
    %s47 = sld [smem:[#allocation6]]
    %v48 = vlaneseq
    %v49 = vand.u32 %v48, 127
    %s50 = smul.u32 0, 128
    %v51 = vstv %s50
    %v52 = vadd.s32 %v49, %v51
    %v53 = vstv %s47
    %vm54 = vcmp.lt.s32.totalorder %v52, %v53
    %v55 = vsel %vm54, 1, 0
    %v56 = vcvt.s32.f32 %v55
    %v57 = vsub.f32 %v45, 0.5
    %v58 = vmul.f32 %v57, 6.2831855
    %v59 = vand.u32 2147483647, %v58
    %vm60 = vcmp.le.f32.partialorder %v59, 0.7853982
    %vm61 = vcmp.lt.s32.totalorder %v58, 0
    %v62 = vand.u32 %v58, 2139095040
    %v63 = vshrl.u32 %v62, 23
    %v64 = vsub.s32 %v63, 127
    %v65 = vand.u32 2147483647, %v58
    %v66 = vand.u32 %v65, 8388607
    %v67 = vor.u32 %v66, 8388608
    %v68 = vsub.s32 0, %v67
    %v69 = vadd.s32 %v64, 1
    %vm70 = vcmp.gt.s32.totalorder %v69, 0
    %v71 = vsel %vm70, %v69, 0
    %v72 = vshrl.u32 %v71, 5
    %v73 = vand.u32 %v71, 31
    %v74 = vsub.s32 32, %v73
    %v75 = vshrl.u32 683565275, %v74
    %v76 = vshll.u32 683565275, %v73
    %v77 = vshrl.u32 2475754826, %v74
    %v78 = vor.u32 %v76, %v77
    %v79 = vshll.u32 2475754826, %v73
    %v80 = vshrl.u32 2131351028, %v74
    %v81 = vor.u32 %v79, %v80
    %v82 = vshll.u32 2131351028, %v73
    %v83 = vshrl.u32 2102212464, %v74
    %v84 = vor.u32 %v82, %v83
    %v85 = vshll.u32 2102212464, %v73
    %v86 = vshrl.u32 920167782, %v74
    %v87 = vor.u32 %v85, %v86
    %v88 = vshll.u32 920167782, %v73
    %v89 = vshrl.u32 1326507024, %v74
    %v90 = vor.u32 %v88, %v89
    %vm91 = vcmp.lt.s32.totalorder %v72, 1
    %vm92 = vcmp.lt.s32.totalorder %v72, 2
    %vm93 = vcmp.lt.s32.totalorder %v72, 3
    %vm94 = vcmp.lt.s32.totalorder %v72, 4
    %v95 = vsel %vm91, %v75, %v78
    %v96 = vsel %vm94, %v84, 2102212464
    %v97 = vsel %vm93, %v81, %v96
    %v98 = vsel %vm92, %v95, %v97
    %v99 = vsel %vm91, %v78, %v81
    %v100 = vsel %vm94, %v87, 920167782
    %v101 = vsel %vm93, %v84, %v100
    %v102 = vsel %vm92, %v99, %v101
    %v103 = vsel %vm91, %v81, %v84
    %v104 = vsel %vm94, %v90, 1326507024
    %v105 = vsel %vm93, %v87, %v104
    %v106 = vsel %vm92, %v103, %v105
    %v107 = vshll.u32 %v67, 8
    %v108 = vmul.u32.u64.compose %v107, %v106
    %v109 = vextract.low.u32 %v108
    %v110 = vextract.high.u32 %v108
    %v111 = vmul.u32.u64.compose %v107, %v102
    %v112 = vextract.low.u32 %v111
    %v113 = vextract.high.u32 %v111
    %v114 = vmul.u32 %v107, %v98
    %v115 = vadd.s32 %v110, %v112
    %vm116 = vc.u32 %v110, %v112
    %v117 = vadd.s32 %v113, 1
    %v118 = vsel %vm116, %v117, %v113
    %v119 = vadd.s32 %v114, %v118
    %v120 = vadd.s32 %v119, 536870912
    %v121 = vshrl.u32 %v120, 30
    %v122 = vshll.u32 %v121, 30
    %v123 = vsub.s32 %v119, %v122
    %vm124 = vcmp.lt.s32.totalorder %v123, 0
    %v125 = vsub.s32 0, %v123
    %v126 = vsel %vm124, %v125, %v123
    %v127 = vclz %v126
    %v128 = vsub.s32 %v127, 2
    %vm129 = vcmp.gt.s32.totalorder 0, %v128
    %v130 = vsel %vm129, 0, %v128
    %v131 = vsub.s32 32, %v130
    %v132 = vshll.u32 %v123, %v130
    %v133 = vshrl.u32 %v115, %v131
    %v134 = vor.u32 %v132, %v133
    %v135 = vsub.s32 4294967266, %v130
    %v136 = vadd.s32 %v135, 127
    %v137 = vshll.u32 %v136, 23
    %v138 = vor.u32 4788187, %v137
    %v139 = vand.u32 2147483647, %v138
    %v141 = vcvt.s32.f32 %v134
    %v142 = vmul.f32 %v141, %v139
    %v143 = vxor.u32 %v142, 2147483648
    %v144 = vsel %vm61, %v143, %v142
    %v145 = vsub.s32 4, %v121
    %v146 = vsel %vm61, %v145, %v121
    %v147 = vsel %vm60, %v58, %v144
    %v148 = vsel %vm60, 0, %v146
    %v149 = vcosq.f32.pop %v147
    %v150 = vsinq.f32.pop %v147
    %vm151 = vweird.f32 %v58
    %v152 = vand.u32 %v148, 3
    %vm153 = vcmp.lt.s32.totalorder %v152, 2
    %vm154 = vcmp.eq.s32.totalorder %v152, 0
    %v155 = vxor.u32 %v150, 2147483648
    %v156 = vsel %vm154, %v149, %v155
    %vm157 = vcmp.eq.s32.totalorder %v152, 2
    %v158 = vxor.u32 %v149, 2147483648
    %v159 = vsel %vm157, %v158, %v150
    %v160 = vsel %vm153, %v156, %v159
    %v161 = vsel %vm151, nan, %v160
    %v162 = vand.u32 2147483647, %v58
    %vm163 = vcmp.le.f32.partialorder %v162, 0.7853982
    %vm164 = vcmp.lt.s32.totalorder %v58, 0
    %v165 = vand.u32 %v58, 2139095040
    %v166 = vshrl.u32 %v165, 23
    %v167 = vsub.s32 %v166, 127
    %v168 = vand.u32 2147483647, %v58
    %v169 = vand.u32 %v168, 8388607
    %v170 = vor.u32 %v169, 8388608
    %v171 = vsub.s32 0, %v170
    %v172 = vadd.s32 %v167, 1
    %vm173 = vcmp.gt.s32.totalorder %v172, 0
    %v174 = vsel %vm173, %v172, 0
    %v175 = vshrl.u32 %v174, 5
    %v176 = vand.u32 %v174, 31
    %v177 = vsub.s32 32, %v176
    %v178 = vshrl.u32 683565275, %v177
    %v179 = vshll.u32 683565275, %v176
    %v180 = vshrl.u32 2475754826, %v177
    %v181 = vor.u32 %v179, %v180
    %v182 = vshll.u32 2475754826, %v176
    %v183 = vshrl.u32 2131351028, %v177
    %v184 = vor.u32 %v182, %v183
    %v185 = vshll.u32 2131351028, %v176
    %v186 = vshrl.u32 2102212464, %v177
    %v187 = vor.u32 %v185, %v186
    %v188 = vshll.u32 2102212464, %v176
    %v189 = vshrl.u32 920167782, %v177
    %v190 = vor.u32 %v188, %v189
    %v191 = vshll.u32 920167782, %v176
    %v192 = vshrl.u32 1326507024, %v177
    %v193 = vor.u32 %v191, %v192
    %vm194 = vcmp.lt.s32.totalorder %v175, 1
    %vm195 = vcmp.lt.s32.totalorder %v175, 2
    %vm196 = vcmp.lt.s32.totalorder %v175, 3
    %vm197 = vcmp.lt.s32.totalorder %v175, 4
    %v198 = vsel %vm194, %v178, %v181
    %v199 = vsel %vm197, %v187, 2102212464
    %v200 = vsel %vm196, %v184, %v199
    %v201 = vsel %vm195, %v198, %v200
    %v202 = vsel %vm194, %v181, %v184
    %v203 = vsel %vm197, %v190, 920167782
    %v204 = vsel %vm196, %v187, %v203
    %v205 = vsel %vm195, %v202, %v204
    %v206 = vsel %vm194, %v184, %v187
    %v207 = vsel %vm197, %v193, 1326507024
    %v208 = vsel %vm196, %v190, %v207
    %v209 = vsel %vm195, %v206, %v208
    %v210 = vshll.u32 %v170, 8
    %v211 = vmul.u32.u64.compose %v210, %v209
    %v212 = vextract.low.u32 %v211
    %v213 = vextract.high.u32 %v211
    %v214 = vmul.u32.u64.compose %v210, %v205
    %v215 = vextract.low.u32 %v214
    %v216 = vextract.high.u32 %v214
    %v217 = vmul.u32 %v210, %v201
    %v218 = vadd.s32 %v213, %v215
    %vm219 = vc.u32 %v213, %v215
    %v220 = vadd.s32 %v216, 1
    %v221 = vsel %vm219, %v220, %v216
    %v222 = vadd.s32 %v217, %v221
    %v223 = vadd.s32 %v222, 536870912
    %v224 = vshrl.u32 %v223, 30
    %v225 = vshll.u32 %v224, 30
    %v226 = vsub.s32 %v222, %v225
    %vm227 = vcmp.lt.s32.totalorder %v226, 0
    %v228 = vsub.s32 0, %v226
    %v229 = vsel %vm227, %v228, %v226
    %v230 = vclz %v229
    %v231 = vsub.s32 %v230, 2
    %vm232 = vcmp.gt.s32.totalorder 0, %v231
    %v233 = vsel %vm232, 0, %v231
    %v234 = vsub.s32 32, %v233
    %v235 = vshll.u32 %v226, %v233
    %v236 = vshrl.u32 %v218, %v234
    %v237 = vor.u32 %v235, %v236
    %v238 = vsub.s32 4294967266, %v233
    %v239 = vadd.s32 %v238, 127
    %v240 = vshll.u32 %v239, 23
    %v241 = vor.u32 4788187, %v240
    %v242 = vand.u32 2147483647, %v241
    %v244 = vcvt.s32.f32 %v237
    %v245 = vmul.f32 %v244, %v242
    %v246 = vxor.u32 %v245, 2147483648
    %v247 = vsel %vm164, %v246, %v245
    %v248 = vsub.s32 4, %v224
    %v249 = vsel %vm164, %v248, %v224
    %v250 = vsel %vm163, %v58, %v247
    %v251 = vsel %vm163, 0, %v249
    %v252 = vcosq.f32.pop %v250
    %v253 = vsinq.f32.pop %v250
    %vm254 = vweird.f32 %v58
    %v255 = vadd.s32 %v251, 3
    %v256 = vand.u32 %v255, 3
    %vm257 = vcmp.lt.s32.totalorder %v256, 2
    %vm258 = vcmp.eq.s32.totalorder %v256, 0
    %v259 = vxor.u32 %v253, 2147483648
    %v260 = vsel %vm258, %v252, %v259
    %vm261 = vcmp.eq.s32.totalorder %v256, 2
    %v262 = vxor.u32 %v252, 2147483648
    %v263 = vsel %vm261, %v262, %v253
    %v264 = vsel %vm257, %v260, %v263
    %v265 = vsel %vm254, nan, %v264
    %v266 = vsub.f32 0.0, %v161
    %v268 = vrot.slane %v265, 7
    %v270 = vmul.f32 %v266, %v268
    %v272 = vrot.slane %v161, 1
    %v274 = vmul.f32 %v161, %v272
    %v275 = vsub.f32 %v46, 0.5
    %v276 = vmul.f32 %v275, 6.2831855
    %v277 = vand.u32 2147483647, %v276
    %vm278 = vcmp.le.f32.partialorder %v277, 0.7853982
    %vm279 = vcmp.lt.s32.totalorder %v276, 0
    %v280 = vand.u32 %v276, 2139095040
    %v281 = vshrl.u32 %v280, 23
    %v282 = vsub.s32 %v281, 127
    %v283 = vand.u32 2147483647, %v276
    %v284 = vand.u32 %v283, 8388607
    %v285 = vor.u32 %v284, 8388608
    %v286 = vsub.s32 0, %v285
    %v287 = vadd.s32 %v282, 1
    %vm288 = vcmp.gt.s32.totalorder %v287, 0
    %v289 = vsel %vm288, %v287, 0
    %v290 = vshrl.u32 %v289, 5
    %v291 = vand.u32 %v289, 31
    %v292 = vsub.s32 32, %v291
    %v293 = vshrl.u32 683565275, %v292
    %v294 = vshll.u32 683565275, %v291
    %v295 = vshrl.u32 2475754826, %v292
    %v296 = vor.u32 %v294, %v295
    %v297 = vshll.u32 2475754826, %v291
    %v298 = vshrl.u32 2131351028, %v292
    %v299 = vor.u32 %v297, %v298
    %v300 = vshll.u32 2131351028, %v291
    %v301 = vshrl.u32 2102212464, %v292
    %v302 = vor.u32 %v300, %v301
    %v303 = vshll.u32 2102212464, %v291
    %v304 = vshrl.u32 920167782, %v292
    %v305 = vor.u32 %v303, %v304
    %v306 = vshll.u32 920167782, %v291
    %v307 = vshrl.u32 1326507024, %v292
    %v308 = vor.u32 %v306, %v307
    %vm309 = vcmp.lt.s32.totalorder %v290, 1
    %vm310 = vcmp.lt.s32.totalorder %v290, 2
    %vm311 = vcmp.lt.s32.totalorder %v290, 3
    %vm312 = vcmp.lt.s32.totalorder %v290, 4
    %v313 = vsel %vm309, %v293, %v296
    %v314 = vsel %vm312, %v302, 2102212464
    %v315 = vsel %vm311, %v299, %v314
    %v316 = vsel %vm310, %v313, %v315
    %v317 = vsel %vm309, %v296, %v299
    %v318 = vsel %vm312, %v305, 920167782
    %v319 = vsel %vm311, %v302, %v318
    %v320 = vsel %vm310, %v317, %v319
    %v321 = vsel %vm309, %v299, %v302
    %v322 = vsel %vm312, %v308, 1326507024
    %v323 = vsel %vm311, %v305, %v322
    %v324 = vsel %vm310, %v321, %v323
    %v325 = vshll.u32 %v285, 8
    %v326 = vmul.u32.u64.compose %v325, %v324
    %v327 = vextract.low.u32 %v326
    %v328 = vextract.high.u32 %v326
    %v329 = vmul.u32.u64.compose %v325, %v320
    %v330 = vextract.low.u32 %v329
    %v331 = vextract.high.u32 %v329
    %v332 = vmul.u32 %v325, %v316
    %v333 = vadd.s32 %v328, %v330
    %vm334 = vc.u32 %v328, %v330
    %v335 = vadd.s32 %v331, 1
    %v336 = vsel %vm334, %v335, %v331
    %v337 = vadd.s32 %v332, %v336
    %v338 = vadd.s32 %v337, 536870912
    %v339 = vshrl.u32 %v338, 30
    %v340 = vshll.u32 %v339, 30
    %v341 = vsub.s32 %v337, %v340
    %vm342 = vcmp.lt.s32.totalorder %v341, 0
    %v343 = vsub.s32 0, %v341
    %v344 = vsel %vm342, %v343, %v341
    %v345 = vclz %v344
    %v346 = vsub.s32 %v345, 2
    %vm347 = vcmp.gt.s32.totalorder 0, %v346
    %v348 = vsel %vm347, 0, %v346
    %v349 = vsub.s32 32, %v348
    %v350 = vshll.u32 %v341, %v348
    %v351 = vshrl.u32 %v333, %v349
    %v352 = vor.u32 %v350, %v351
    %v353 = vsub.s32 4294967266, %v348
    %v354 = vadd.s32 %v353, 127
    %v355 = vshll.u32 %v354, 23
    %v356 = vor.u32 4788187, %v355
    %v357 = vand.u32 2147483647, %v356
    %v359 = vcvt.s32.f32 %v352
    %v360 = vmul.f32 %v359, %v357
    %v361 = vxor.u32 %v360, 2147483648
    %v362 = vsel %vm279, %v361, %v360
    %v363 = vsub.s32 4, %v339
    %v364 = vsel %vm279, %v363, %v339
    %v365 = vsel %vm278, %v276, %v362
    %v366 = vsel %vm278, 0, %v364
    %v367 = vcosq.f32.pop %v365
    %v368 = vsinq.f32.pop %v365
    %vm369 = vweird.f32 %v276
    %v370 = vand.u32 %v366, 3
    %vm371 = vcmp.lt.s32.totalorder %v370, 2
    %vm372 = vcmp.eq.s32.totalorder %v370, 0
    %v373 = vxor.u32 %v368, 2147483648
    %v374 = vsel %vm372, %v367, %v373
    %vm375 = vcmp.eq.s32.totalorder %v370, 2
    %v376 = vxor.u32 %v367, 2147483648
    %v377 = vsel %vm375, %v376, %v368
    %v378 = vsel %vm371, %v374, %v377
    %v379 = vsel %vm369, nan, %v378
    %v380 = vand.u32 2147483647, %v276
    %vm381 = vcmp.le.f32.partialorder %v380, 0.7853982
    %vm382 = vcmp.lt.s32.totalorder %v276, 0
    %v383 = vand.u32 %v276, 2139095040
    %v384 = vshrl.u32 %v383, 23
    %v385 = vsub.s32 %v384, 127
    %v386 = vand.u32 2147483647, %v276
    %v387 = vand.u32 %v386, 8388607
    %v388 = vor.u32 %v387, 8388608
    %v389 = vsub.s32 0, %v388
    %v390 = vadd.s32 %v385, 1
    %vm391 = vcmp.gt.s32.totalorder %v390, 0
    %v392 = vsel %vm391, %v390, 0
    %v393 = vshrl.u32 %v392, 5
    %v394 = vand.u32 %v392, 31
    %v395 = vsub.s32 32, %v394
    %v396 = vshrl.u32 683565275, %v395
    %v397 = vshll.u32 683565275, %v394
    %v398 = vshrl.u32 2475754826, %v395
    %v399 = vor.u32 %v397, %v398
    %v400 = vshll.u32 2475754826, %v394
    %v401 = vshrl.u32 2131351028, %v395
    %v402 = vor.u32 %v400, %v401
    %v403 = vshll.u32 2131351028, %v394
    %v404 = vshrl.u32 2102212464, %v395
    %v405 = vor.u32 %v403, %v404
    %v406 = vshll.u32 2102212464, %v394
    %v407 = vshrl.u32 920167782, %v395
    %v408 = vor.u32 %v406, %v407
    %v409 = vshll.u32 920167782, %v394
    %v410 = vshrl.u32 1326507024, %v395
    %v411 = vor.u32 %v409, %v410
    %vm412 = vcmp.lt.s32.totalorder %v393, 1
    %vm413 = vcmp.lt.s32.totalorder %v393, 2
    %vm414 = vcmp.lt.s32.totalorder %v393, 3
    %vm415 = vcmp.lt.s32.totalorder %v393, 4
    %v416 = vsel %vm412, %v396, %v399
    %v417 = vsel %vm415, %v405, 2102212464
    %v418 = vsel %vm414, %v402, %v417
    %v419 = vsel %vm413, %v416, %v418
    %v420 = vsel %vm412, %v399, %v402
    %v421 = vsel %vm415, %v408, 920167782
    %v422 = vsel %vm414, %v405, %v421
    %v423 = vsel %vm413, %v420, %v422
    %v424 = vsel %vm412, %v402, %v405
    %v425 = vsel %vm415, %v411, 1326507024
    %v426 = vsel %vm414, %v408, %v425
    %v427 = vsel %vm413, %v424, %v426
    %v428 = vshll.u32 %v388, 8
    %v429 = vmul.u32.u64.compose %v428, %v427
    %v430 = vextract.low.u32 %v429
    %v431 = vextract.high.u32 %v429
    %v432 = vmul.u32.u64.compose %v428, %v423
    %v433 = vextract.low.u32 %v432
    %v434 = vextract.high.u32 %v432
    %v435 = vmul.u32 %v428, %v419
    %v436 = vadd.s32 %v431, %v433
    %vm437 = vc.u32 %v431, %v433
    %v438 = vadd.s32 %v434, 1
    %v439 = vsel %vm437, %v438, %v434
    %v440 = vadd.s32 %v435, %v439
    %v441 = vadd.s32 %v440, 536870912
    %v442 = vshrl.u32 %v441, 30
    %v443 = vshll.u32 %v442, 30
    %v444 = vsub.s32 %v440, %v443
    %vm445 = vcmp.lt.s32.totalorder %v444, 0
    %v446 = vsub.s32 0, %v444
    %v447 = vsel %vm445, %v446, %v444
    %v448 = vclz %v447
    %v449 = vsub.s32 %v448, 2
    %vm450 = vcmp.gt.s32.totalorder 0, %v449
    %v451 = vsel %vm450, 0, %v449
    %v452 = vsub.s32 32, %v451
    %v453 = vshll.u32 %v444, %v451
    %v454 = vshrl.u32 %v436, %v452
    %v455 = vor.u32 %v453, %v454
    %v456 = vsub.s32 4294967266, %v451
    %v457 = vadd.s32 %v456, 127
    %v458 = vshll.u32 %v457, 23
    %v459 = vor.u32 4788187, %v458
    %v460 = vand.u32 2147483647, %v459
    %v462 = vcvt.s32.f32 %v455
    %v463 = vmul.f32 %v462, %v460
    %v464 = vxor.u32 %v463, 2147483648
    %v465 = vsel %vm382, %v464, %v463
    %v466 = vsub.s32 4, %v442
    %v467 = vsel %vm382, %v466, %v442
    %v468 = vsel %vm381, %v276, %v465
    %v469 = vsel %vm381, 0, %v467
    %v470 = vcosq.f32.pop %v468
    %v471 = vsinq.f32.pop %v468
    %vm472 = vweird.f32 %v276
    %v473 = vadd.s32 %v469, 3
    %v474 = vand.u32 %v473, 3
    %vm475 = vcmp.lt.s32.totalorder %v474, 2
    %vm476 = vcmp.eq.s32.totalorder %v474, 0
    %v477 = vxor.u32 %v471, 2147483648
    %v478 = vsel %vm476, %v470, %v477
    %vm479 = vcmp.eq.s32.totalorder %v474, 2
    %v480 = vxor.u32 %v470, 2147483648
    %v481 = vsel %vm479, %v480, %v471
    %v482 = vsel %vm475, %v478, %v481
    %v483 = vsel %vm472, nan, %v482
    %v484 = vsub.f32 0.0, %v379
    %v486 = vrot.slane %v483, 7
    %v488 = vmul.f32 %v484, %v486
    %v490 = vrot.slane %v379, 1
    %v492 = vmul.f32 %v379, %v490
    %v494 = vrot.slane %v492, 7
    %v496 = vmul.f32 %v270, %v494
    %v498 = vrot.slane %v488, 1
    %v500 = vmul.f32 %v274, %v498
    %v502 = vrot.slane %v500, 7
    %v504 = vsub.f32 %v496, %v502
    %v505 = vrot.slane %v483, 1
    %v507 = vmul.f32 %v274, %v505
    %v508 = vmul.f32 %v265, %v494
    %v510 = vrot.slane %v508, 1
    %v512 = vsub.f32 %v507, %v510
    %v513 = vmul.f32 %v265, %v488
    %v514 = vmul.f32 %v270, %v483
    %v515 = vsub.f32 %v513, %v514
    %v516 = vmul.f32 %v504, %v504
    %v517 = vmul.f32 %v512, %v512
    %v519 = vrot.slane %v517, 7
    %v521 = vadd.f32 %v516, %v519
    %v522 = vmul.f32 %v515, %v515
    %v523 = vadd.f32 %v521, %v522
    %v524 = vmul.f32 %v523, %v56
    %v525 = vmul.f32 %v265, %v483
    %v526 = vmul.f32 %v270, %v488
    %v527 = vadd.f32 %v525, %v526
    %v528 = vmul.f32 %v274, %v492
    %v530 = vrot.slane %v528, 7
    %v532 = vadd.f32 %v527, %v530
    %v533 = vmul.f32 %v532, %v56
    %v534 = vsub.f32 %v45, %v46
    %v535 = vmul.f32 %v534, %v534
    %vm536 = vcmask 1043456
    %v537 = vsel %vm536, %v535, 0.0
    %v538 = vrot.slane %v537, 4
    %v539 = vadd.f32 %v537, %v538
    %v540 = vrot.slane %v539, 2
    %v541 = vadd.f32 %v539, %v540
    %v542 = vrot.slane %v541, 1
    %v543 = vadd.f32 %v541, %v542
    %v544 = vmul.f32 %v543, %v56
    %v545 = vld [vmem:[#allocation2] sm:$0x1]
    %v547 = vcombine.high %v524, %v524
    %v549 = vunpack.c.l.s4 1966171168
    %v550 = vunpack.c.0.s8 %v549
    %v551 = vlaneseq
    %v552 = vshrl.u32 %v551, 7
    %v553 = vsub.s32 %v550, %v552
    %v554 = vrot.slane %v547, %v553
    %v555 = vcombine.high %v554, %v554
    %v557 = vunpack.c.l.s4 1966171168
    %v558 = vunpack.c.0.s8 %v557
    %v559 = vlaneseq
    %v560 = vshrl.u32 %v559, 7
    %v561 = vsub.s32 %v558, %v560
    %v562 = vrot.slane %v555, %v561
    %v564 = vadd.f32 %v545, %v562
    %565 = vst [vmem:[#allocation2] sm:$0x1] %v564
    %v566 = vld [vmem:[#allocation3] sm:$0x1]
    %v568 = vcombine.high %v533, %v533
    %v570 = vunpack.c.l.s4 1966171168
    %v571 = vunpack.c.0.s8 %v570
    %v572 = vlaneseq
    %v573 = vshrl.u32 %v572, 7
    %v574 = vsub.s32 %v571, %v573
    %v575 = vrot.slane %v568, %v574
    %v576 = vcombine.high %v575, %v575
    %v578 = vunpack.c.l.s4 1966171168
    %v579 = vunpack.c.0.s8 %v578
    %v580 = vlaneseq
    %v581 = vshrl.u32 %v580, 7
    %v582 = vsub.s32 %v579, %v581
    %v583 = vrot.slane %v576, %v582
    %v585 = vadd.f32 %v566, %v583
    %586 = vst [vmem:[#allocation3] sm:$0x1] %v585
    %v587 = vld [vmem:[#allocation4] sm:$0x1]
    %v588 = vadd.f32 %v587, %v544
    %589 = vst [vmem:[#allocation4] sm:$0x1] %v588
    // Predicated region
    $region22: #{tpu_custom_call.1} parent=1 // pred_check
      %p590 = pneg %p38
    $region23: #{tpu_custom_call.1} parent=1 // pred_check_branch
      %592 = sbr.rel (%p590) target = $region25
    $region24: #{tpu_custom_call.1} parent=1 // pred_region
      %s593 = scvt.s32.f32 %s47
      %v594 = vld [vmem:[#allocation2] sm:$0x1]
      %vm595 = vcmask 1040384
      %v596 = vsel %vm595, %v594, 0.0
      %597 = vadd.xlane.f32.xlu0 %v596
      %v598 = vpop.xlane.xlu0 %597
      %v599 = vrot.slane %v598, 4
      %v600 = vadd.f32 %v598, %v599
      %v601 = vrot.slane %v600, 2
      %v602 = vadd.f32 %v600, %v601
      %v603 = vrot.slane %v602, 1
      %v604 = vadd.f32 %v602, %v603
      %s605 = vtos %v604
      %v606 = vld [vmem:[#allocation3] sm:$0x1]
      %v607 = vsel %vm595, %v606, 0.0
      %608 = vadd.xlane.f32.xlu0 %v607
      %v609 = vpop.xlane.xlu0 %608
      %v610 = vrot.slane %v609, 4
      %v611 = vadd.f32 %v609, %v610
      %v612 = vrot.slane %v611, 2
      %v613 = vadd.f32 %v611, %v612
      %v614 = vrot.slane %v613, 1
      %v615 = vadd.f32 %v613, %v614
      %s616 = vtos %v615
      %v617 = vld [vmem:[#allocation4] sm:$0x1]
      %v618 = vsel %vm595, %v617, 0.0
      %619 = vadd.xlane.f32.xlu0 %v618
      %v620 = vpop.xlane.xlu0 %619
      %v621 = vrot.slane %v620, 4
      %v622 = vadd.f32 %v620, %v621
      %v623 = vrot.slane %v622, 2
      %v624 = vadd.f32 %v622, %v623
      %v625 = vrot.slane %v624, 1
      %v626 = vadd.f32 %v624, %v625
      %s627 = vtos %v626
      %v628 = vstv %s605
      %v629 = vrsqrt.pop %v628
      %v630 = vmul.f32 %v628, %v629
      %vm631 = vcmp.eq.f32.partialorder %v628, inf
      %v632 = vsel %vm631, %v628, %v630
      %vm633 = vcmp.eq.f32.partialorder %v628, 0.0
      %v634 = vand.u32 %v628, 2147483648
      %v635 = vsel %vm633, %v634, %v632
      %s636 = vtos %v635
      %s637 = sadd.f32 %s636, 1.0
      %v638 = vstv %s593
      %v639 = vrcp.pop %v638
      %s640 = vtos %v639
      %s641 = smul.f32 %s616, %s640
      %s642 = ssub.f32 %s637, %s641
      %v643 = vstv %s593
      %v644 = vrcp.pop %v643
      %s645 = vtos %v644
      %s646 = smul.f32 %s627, %s645
      %s647 = sadd.f32 %s642, %s646
      %s648 = scalar_lea.smem [#allocation12], 0
      %649 = sst [smem:[%s648]] %s647
      %s650 = scalar_lea.smem [#allocation12], 1
      %651 = sst [smem:[%s650]] %s642
      %s652 = scalar_lea.smem [#allocation12], 2
      %653 = sst [smem:[%s652]] %s646
    $region25: #{tpu_custom_call.1} parent=1 // pred_fallthru
      _
    // Predicated region
    $region26: #{tpu_custom_call.1} parent=1 // pred_check
      _
    $region27: #{tpu_custom_call.1} parent=1 // pred_check_branch
      %655 = sbr.rel (0) target = $region29
    $region28: #{tpu_custom_call.1} parent=1 // pred_region
      %s657 = ssub.s32 16, 16
      %658 = vsyncadd [#allocation9], %s657
      %661 = dma.smem_to_hbm [#allocation12], 16, %s3, [#allocation9]
    $region29: #{tpu_custom_call.1} parent=1 // pred_fallthru
      _
    // Predicated region
    $region30: #{tpu_custom_call.1} parent=1 // pred_check
      _
    $region31: #{tpu_custom_call.1} parent=1 // pred_check_branch
      %663 = sbr.rel (0) target = $region33
    $region32: #{tpu_custom_call.1} parent=1 // pred_region
      %664 = dma.done [#allocation9], 16
    $region33: #{tpu_custom_call.1} parent=1 // pred_fallthru
      _
    %665 = sfence
    %666 = vsyncpa [#allocation8], 1
    %667 = vsyncpa [#allocation11], 1
    %668 = vsyncpa [#allocation9], 1

</llo_original>
